<compile_context>
chip_gen: v7x
topology: tpu7x:2x2x1
jax: 0.10.0
libtpu: 0.0.40
codegen_flags: <defaults>
</compile_context>

<pallas_src>
import functools

import jax
import jax.numpy as jnp
from jax import lax
from jax.experimental import pallas as pl
from jax.experimental.pallas import tpu as pltpu


def value_net_kernel(x_ref, w1_ref, b1_ref, w2_ref, b2_ref, o_ref):
    # x_ref : [TB, D]  natural layout (batch on sublanes), stored dtype
    # w1_ref: [H, D]   resident
    # b1_ref: [H, 1]   f32
    # w2_ref: [H, 1]   f32 (fc2 weight as a column)
    # b2_ref: [1, 1]   f32 scalar in SMEM
    # o_ref : [1, TB]  f32 (lane-dense output)
    #
    # NOTE: when B % block_b != 0 the tail tile contains padded/garbage batch
    # rows.  That is benign ONLY because every op below is per-batch-column
    # (no cross-batch mixing) and out-of-range output lanes are masked on store.
    # Do not add a batch-axis reduction here without handling the tail.

    # fc1: contract D of w1[H,D] with D of x[TB,D] -> h[H,TB].  Batch ends up on
    # the lane axis without any wrapper-side transpose of x.
    h = lax.dot_general(
        w1_ref[...], x_ref[...],
        dimension_numbers=(((1,), (1,)), ((), ())),
        preferred_element_type=jnp.float32)                    # [H, TB]  MXU
    h = jnp.maximum(h + b1_ref[...], 0.0)                      # bias + ReLU (f32 VPU)

    H = w2_ref.shape[0]
    if H >= 512:
        # Large H: 1-row MXU matmul keeps the VALU/XLU slots free.
        v = jnp.dot(w2_ref[...].T, h,
                    preferred_element_type=jnp.float32)        # [1, TB]  MXU
    else:
        # Small H: VPU broadcast-multiply + sublane (XLU) reduction.
        v = jnp.sum(h * w2_ref[...], axis=0, keepdims=True)    # [1, TB]  VPU + XLU

    o_ref[...] = (v + b2_ref[0, 0]).astype(o_ref.dtype)


@functools.partial(jax.jit, static_argnames=("block_b",))
def value_net_forward(x, w1, b1, w2, b2, *, block_b=8192):
    """x: [B, D]; w1: [H, D]; b1: [H]; w2: [1, H]; b2: [1] (PyTorch nn.Linear layout)."""
    B, D = x.shape
    H = w1.shape[0]

    # Lane-aligned batch tiles.  Big tiles amortize per-grid-step overhead and
    # turn the x DMA rows into multi-KB contiguous transfers.
    if block_b >= B:
        block_b = B
    else:
        block_b = max(128, (block_b // 128) * 128)
    # v7x megacore: keep >= 2 grid steps when the batch is large enough to split.
    if B >= 256:
        half = ((pl.cdiv(B, 2) + 127) // 128) * 128
        block_b = min(block_b, half)
    grid_b = pl.cdiv(B, block_b)

    x_c = x.astype(jnp.float32)                       # stored dtype; no extra HBM pass
    w1_c = w1.astype(jnp.float32)                     # [H, D] tiny, grid-resident
    b1_c = b1.reshape(H, 1).astype(jnp.float32)       # [H, 1]
    w2_c = w2.reshape(H, 1).astype(jnp.float32)       # [H, 1]
    b2_c = b2.reshape(1, 1).astype(jnp.float32)       # [1, 1] -> SMEM scalar

    cost = pl.CostEstimate(
        flops=2 * B * D * H + 2 * B * H,
        transcendentals=0,
        bytes_accessed=(B * D * 4 + H * D * 4 + H * 4 + H * 4 + 4 + B * 4),
    )

    out = pl.pallas_call(
        value_net_kernel,
        out_shape=jax.ShapeDtypeStruct((1, B), jnp.float32),
        grid_spec=pltpu.PrefetchScalarGridSpec(
            num_scalar_prefetch=0,
            grid=(grid_b,),
            in_specs=[
                pl.BlockSpec((block_b, D), lambda i: (i, 0)),        # x tile (natural)
                pl.BlockSpec((H, D), lambda i: (0, 0)),              # w1 (resident)
                pl.BlockSpec((H, 1), lambda i: (0, 0)),              # b1
                pl.BlockSpec((H, 1), lambda i: (0, 0)),              # w2 column
                pl.BlockSpec(memory_space=pltpu.MemorySpace.SMEM),   # b2 scalar
            ],
            out_specs=pl.BlockSpec((1, block_b), lambda i: (0, i)),  # lane-dense out
        ),
        compiler_params=pltpu.CompilerParams(
            dimension_semantics=("parallel",),
            # 32 MiB is v7x-safe (64 MiB physical VMEM there); working set at
            # block_b=8192, D=16 is only a few MiB anyway.
            vmem_limit_bytes=32 * 1024 * 1024,
        ),
        cost_estimate=cost,
    )(x_c, w1_c, b1_c, w2_c, b2_c)

    return out.T  # [B, 1] to match the PyTorch module's output


def _reference(x, w1, b1, w2, b2):
    return jnp.maximum(x @ w1.T + b1, 0.0) @ w2.T + b2


if __name__ == "__main__":
    key = jax.random.PRNGKey(0)
    input_dim, hidden_dim = 16, 32

    kx, k1, k2, k3, k4, kx2 = jax.random.split(key, 6)
    lim1 = 1.0 / float(input_dim) ** 0.5
    lim2 = 1.0 / float(hidden_dim) ** 0.5
    # PyTorch nn.Linear layout / default init ranges.
    w1 = jax.random.uniform(k1, (hidden_dim, input_dim), jnp.float32, -lim1, lim1)
    b1 = jax.random.uniform(k2, (hidden_dim,), jnp.float32, -lim1, lim1)
    w2 = jax.random.uniform(k3, (1, hidden_dim), jnp.float32, -lim2, lim2)
    b2 = jax.random.uniform(k4, (1,), jnp.float32, -lim2, lim2)

    # Small batch (single tile path).
    batch = 8
    x = jax.random.normal(kx, (batch, input_dim), jnp.float32)
    out = jax.block_until_ready(value_net_forward(x, w1, b1, w2, b2))
    assert out.shape == (batch, 1)
    assert jnp.allclose(out, _reference(x, w1, b1, w2, b2), atol=1e-5, rtol=1e-5)

    # Larger batch with a ragged tail (multi-tile grid + masked tail store path).
    batch2 = 1000
    x2 = jax.random.normal(kx2, (batch2, input_dim), jnp.float32)
    out2 = jax.block_until_ready(value_net_forward(x2, w1, b1, w2, b2))
    assert out2.shape == (batch2, 1)
    assert jnp.allclose(out2, _reference(x2, w1, b1, w2, b2), atol=1e-5, rtol=1e-5)

    print("KERNEL_OK")
</pallas_src>

<mosaic_0001>
module attributes {stable_mosaic.version = 11 : i64} {
  func.func @value_net_kernel(%arg0: i32, %arg1: memref<8x16xf32, #tpu.memory_space<vmem>>, %arg2: memref<32x16xf32, #tpu.memory_space<vmem>>, %arg3: memref<32x1xf32, #tpu.memory_space<vmem>>, %arg4: memref<32x1xf32, #tpu.memory_space<vmem>>, %arg5: memref<1x1xf32, #tpu.memory_space<smem>>, %arg6: memref<1x8xf32, #tpu.memory_space<vmem>>) attributes {dimension_semantics = [#tpu.dimension_semantics<parallel>], iteration_bounds = array<i64: 1>, scalar_prefetch = 0 : i64, scratch_operands = 0 : i64, tpu.core_type = #tpu.core_type<tc>, window_params = [{transform_indices = @transform_0, window_bounds = array<i64: 8, 16>}, {pipeline_mode = #tpu.pipeline_mode<synchronous>, transform_indices = @transform_1, window_bounds = array<i64: 32, 16>}, {pipeline_mode = #tpu.pipeline_mode<synchronous>, transform_indices = @transform_2, window_bounds = array<i64: 32, 1>}, {pipeline_mode = #tpu.pipeline_mode<synchronous>, transform_indices = @transform_3, window_bounds = array<i64: 32, 1>}, {transform_indices = @transform_4, window_bounds = array<i64: 1, 1>}, {transform_indices = @transform_5, window_bounds = array<i64: 1, 8>}]} {
    %c0 = arith.constant 0 : index
    %c0_0 = arith.constant 0 : index
    %0 = vector.load %arg2[%c0, %c0_0] : memref<32x16xf32, #tpu.memory_space<vmem>>, vector<32x16xf32>
    %c0_1 = arith.constant 0 : index
    %c0_2 = arith.constant 0 : index
    %1 = vector.load %arg1[%c0_1, %c0_2] : memref<8x16xf32, #tpu.memory_space<vmem>>, vector<8x16xf32>
    %cst = arith.constant dense<0.000000e+00> : vector<32x8xf32>
    %2 = tpu.matmul %0, %1, %cst {dimension_numbers = #tpu.dot_dimension_numbers<[1], [1], [0], [0], [0, 0, 1, 0], [], []>} : vector<32x16xf32>, vector<8x16xf32>, vector<32x8xf32> -> vector<32x8xf32>
    %c0_3 = arith.constant 0 : index
    %c0_4 = arith.constant 0 : index
    %3 = vector.load %arg3[%c0_3, %c0_4] : memref<32x1xf32, #tpu.memory_space<vmem>>, vector<32x1xf32>
    %4 = vector.broadcast %3 : vector<32x1xf32> to vector<32x8xf32>
    %5 = arith.addf %2, %4 : vector<32x8xf32>
    %cst_5 = arith.constant 0.000000e+00 : f32
    %6 = vector.broadcast %cst_5 : f32 to vector<32x8xf32>
    %7 = arith.maximumf %5, %6 : vector<32x8xf32>
    %c0_6 = arith.constant 0 : index
    %c0_7 = arith.constant 0 : index
    %8 = vector.load %arg4[%c0_6, %c0_7] : memref<32x1xf32, #tpu.memory_space<vmem>>, vector<32x1xf32>
    %9 = vector.broadcast %8 : vector<32x1xf32> to vector<32x8xf32>
    %10 = arith.mulf %7, %9 : vector<32x8xf32>
    %cst_8 = arith.constant dense<0.000000e+00> : vector<8xf32>
    %11 = vector.multi_reduction <add>, %10, %cst_8 [0] : vector<32x8xf32> to vector<8xf32>
    %12 = vector.shape_cast %11 : vector<8xf32> to vector<1x8xf32>
    %c0_9 = arith.constant 0 : index
    %c0_10 = arith.constant 0 : index
    %13 = memref.load %arg5[%c0_9, %c0_10] : memref<1x1xf32, #tpu.memory_space<smem>>
    %14 = vector.broadcast %13 : f32 to vector<1x8xf32>
    %15 = arith.addf %12, %14 : vector<1x8xf32>
    %c0_11 = arith.constant 0 : index
    %c0_12 = arith.constant 0 : index
    %16 = vector.load %arg6[%c0_11, %c0_12] : memref<1x8xf32, #tpu.memory_space<vmem>>, vector<1x8xf32>
    tpu.vector_store %arg6[%c0_11, %c0_12], %15 {strides = array<i32>} : memref<1x8xf32, #tpu.memory_space<vmem>>, vector<1x8xf32>,
    return
  }
  func.func @transform_0(%arg0: i32) -> (i32, i32) {
    %c0_i32 = arith.constant 0 : i32
    %c0_i32_0 = arith.constant 0 : i32
    return %arg0, %c0_i32 : i32, i32
  }
  func.func @transform_1(%arg0: i32) -> (i32, i32) {
    %c0_i32 = arith.constant 0 : i32
    %c0_i32_0 = arith.constant 0 : i32
    %c0_i32_1 = arith.constant 0 : i32
    return %c0_i32, %c0_i32_0 : i32, i32
  }
  func.func @transform_2(%arg0: i32) -> (i32, i32) {
    %c0_i32 = arith.constant 0 : i32
    %c0_i32_0 = arith.constant 0 : i32
    %c0_i32_1 = arith.constant 0 : i32
    return %c0_i32, %c0_i32_0 : i32, i32
  }
  func.func @transform_3(%arg0: i32) -> (i32, i32) {
    %c0_i32 = arith.constant 0 : i32
    %c0_i32_0 = arith.constant 0 : i32
    %c0_i32_1 = arith.constant 0 : i32
    return %c0_i32, %c0_i32_0 : i32, i32
  }
  func.func @transform_4(%arg0: i32) -> (i32, i32) {
    %c0_i32 = arith.constant 0 : i32
    %c0_i32_0 = arith.constant 0 : i32
    %c0_i32_1 = arith.constant 0 : i32
    return %c0_i32, %c0_i32_0 : i32, i32
  }
  func.func @transform_5(%arg0: i32) -> (i32, i32) {
    %c0_i32 = arith.constant 0 : i32
    %c0_i32_0 = arith.constant 0 : i32
    return %c0_i32, %arg0 : i32, i32
  }
}

</mosaic_0001>

<llo_original>
// kernel: value_net_forward.1
$region0: #{value_net_forward.1}
  #allocation0 [shape = 'u32[]', space=smem, size = 0x4, offset = 0x4, fixed_abs, tag = 'smem constant byte address 0x4 - core index']
  #allocation1 [shape = 'u32[144,128]{1,0:T(1,128)}', space=vmem, size = 0x12000, scoped, tag = 'internal scratch']
  #allocation2 [shape = 'f32[1,1]{1,0:T(1,128)S(6)}', space=smem, size = 0x200, scoped, tag = 'scoped memory for value_net_forward.1']
  %s0 = inlined_call_operand.vmem [shape: f32[8,16], index: 0, kind: input, shape index: {}]
  %s1 = inlined_call_operand.vmem [shape: f32[32,16], index: 1, kind: input, shape index: {}]
  %s2 = inlined_call_operand.vmem [shape: f32[32,1], index: 2, kind: input, shape index: {}]
  %s3 = inlined_call_operand.vmem [shape: f32[32,1], index: 3, kind: input, shape index: {}]
  %s4 = inlined_call_operand.<no memory space> [shape: f32[1,1], index: 4, kind: input, shape index: {}]
  %s5 = inlined_call_operand.hbm [shape: f32[1,8], index: 5, kind: output, shape index: {}]
  %s6 = sld [smem:[#allocation0]]
  $region30: #{value_net_forward.1} parent=0
    _
  %s8 = ssub.s32 1, %s6
  %s9 = scalar_select 0, %s8, %s6
  %10 = sst [smem:[#allocation2]] %s4
  $region1: #{value_net_forward.1} parent=0
    #allocation3 [shape = 'u8[512]{0}', space=vmem, size = 0x400, scoped, tag = 'output window, operand 0, single buffered']
    #allocation4 [shape = 's32[1]{0}', space=sflag, size = 0x4, scoped, tag = 'scoped memory for value_net_forward.1']
    %11 = vsyncpa [#allocation4], 0
    // Predicated region
    $region2: #{value_net_forward.1} parent=1 // pred_check
      _
    $region3: #{value_net_forward.1} parent=1 // pred_check_branch
      %13 = sbr.rel (0) target = $region5
    $region4: #{value_net_forward.1} parent=1 // pred_region
      _
    $region5: #{value_net_forward.1} parent=1 // pred_fallthru
      _
    // Predicated region
    $region6: #{value_net_forward.1} parent=1 // pred_check
      _
    $region7: #{value_net_forward.1} parent=1 // pred_check_branch
      %15 = sbr.rel (0) target = $region9
    $region8: #{value_net_forward.1} parent=1 // pred_region
      _
    $region9: #{value_net_forward.1} parent=1 // pred_fallthru
      _
    // Predicated region
    $region10: #{value_net_forward.1} parent=1 // pred_check
      _
    $region11: #{value_net_forward.1} parent=1 // pred_check_branch
      %17 = sbr.rel (0) target = $region13
    $region12: #{value_net_forward.1} parent=1 // pred_region
      _
    $region13: #{value_net_forward.1} parent=1 // pred_fallthru
      _
    // Predicated region
    $region14: #{value_net_forward.1} parent=1 // pred_check
      _
    $region15: #{value_net_forward.1} parent=1 // pred_check_branch
      %19 = sbr.rel (0) target = $region17
    $region16: #{value_net_forward.1} parent=1 // pred_region
      _
    $region17: #{value_net_forward.1} parent=1 // pred_fallthru
      _
    // Predicated region
    $region18: #{value_net_forward.1} parent=1 // pred_check
      _
    $region19: #{value_net_forward.1} parent=1 // pred_check_branch
      %21 = sbr.rel (0) target = $region21
    $region20: #{value_net_forward.1} parent=1 // pred_region
      _
    $region21: #{value_net_forward.1} parent=1 // pred_fallthru
      _
    %v22 = vld [vmem:[%s1] sm:$0xff]
    %v23 = vld [vmem:[%s1 + $0x8] sm:$0xff]
    %v24 = vld [vmem:[%s1 + $0x10] sm:$0xff]
    %v25 = vld [vmem:[%s1 + $0x18] sm:$0xff]
    %v26 = vld [vmem:[%s0] sm:$0xff]
    %v27 = vld [vmem:[%s2] sm:$0xff]
    %v28 = vld [vmem:[%s2 + $0x8] sm:$0xff]
    %v29 = vld [vmem:[%s2 + $0x10] sm:$0xff]
    %v30 = vld [vmem:[%s2 + $0x18] sm:$0xff]
    %32 = vset.pattern.permute.xlu0 0
    %33 = vperm.xlu0 %32, %v27
    %v34 = vpop.permute.xlu0 %33
    %37 = vset.pattern.permute.xlu0 0
    %38 = vperm.xlu0 %37, %v28
    %v39 = vpop.permute.xlu0 %38
    %42 = vset.pattern.permute.xlu0 0
    %43 = vperm.xlu0 %42, %v29
    %v44 = vpop.permute.xlu0 %43
    %47 = vset.pattern.permute.xlu0 0
    %48 = vperm.xlu0 %47, %v30
    %v49 = vpop.permute.xlu0 %48
    %vm51 = vcmask 130048
    %v53 = vsel %vm51, %v22, 0
    %v56 = vsel %vm51, %v23, 0
    %v59 = vsel %vm51, %v24, 0
    %v62 = vsel %vm51, %v25, 0
    %v65 = vsel %vm51, %v26, 0
    %67 = vmatprep.subr.mxu0 0.0
    %68 = vmatpush1.xpose.msra.mxu0 %v65
    %69 = vmatprep.subr.mxu0 0.0
    %70 = vmatpush1.xpose.msra.mxu0 0.0
    %71 = vmatprep.subr.mxu0 0.0
    %72 = vmatpush1.xpose.msra.mxu0 0.0
    %73 = vmatprep.subr.mxu0 0.0
    %74 = vmatpush1.xpose.msra.mxu0 0.0
    %75 = vmatprep.subr.mxu0 0.0
    %76 = vmatpush1.xpose.msra.mxu0 0.0
    %77 = vmatprep.subr.mxu0 0.0
    %78 = vmatpush1.xpose.msra.mxu0 0.0
    %79 = vmatprep.subr.mxu0 0.0
    %80 = vmatpush1.xpose.msra.mxu0 0.0
    %81 = vmatprep.subr.mxu0 0.0
    %82 = vmatpush1.xpose.msra.mxu0 0.0
    %83 = vmatprep.subr.mxu0 0.0
    %84 = vmatpush1.xpose.msra.mxu0 0.0
    %85 = vmatprep.subr.mxu0 0.0
    %86 = vmatpush1.xpose.msra.mxu0 0.0
    %87 = vmatprep.subr.mxu0 0.0
    %88 = vmatpush1.xpose.msra.mxu0 0.0
    %89 = vmatprep.subr.mxu0 0.0
    %90 = vmatpush1.xpose.msra.mxu0 0.0
    %91 = vmatprep.subr.mxu0 0.0
    %92 = vmatpush1.xpose.msra.mxu0 0.0
    %93 = vmatprep.subr.mxu0 0.0
    %94 = vmatpush1.xpose.msra.mxu0 0.0
    %95 = vmatprep.subr.mxu0 0.0
    %96 = vmatpush1.xpose.msra.mxu0 0.0
    %97 = vmatprep.subr.mxu0 0.0
    %98 = vmatpush1.xpose.msra.mxu0 0.0
    %99 = vmatprep.subr.mxu0 0.0
    %100 = vmatpush1.xpose.msra.mxu0 0.0
    %101 = vmatprep.subr.mxu0 0.0
    %102 = vmatpush1.xpose.msra.mxu0 0.0
    %103 = vmatprep.subr.mxu0 0.0
    %104 = vmatpush1.xpose.msra.mxu0 0.0
    %105 = vmatprep.subr.mxu0 0.0
    %106 = vmatpush1.xpose.msra.mxu0 0.0
    %107 = vmatprep.subr.mxu0 0.0
    %108 = vmatpush1.xpose.msra.mxu0 0.0
    %109 = vmatprep.subr.mxu0 0.0
    %110 = vmatpush1.xpose.msra.mxu0 0.0
    %111 = vmatprep.subr.mxu0 0.0
    %112 = vmatpush1.xpose.msra.mxu0 0.0
    %113 = vmatprep.subr.mxu0 0.0
    %114 = vmatpush1.xpose.msra.mxu0 0.0
    %115 = vmatprep.subr.mxu0 0.0
    %116 = vmatpush1.xpose.msra.mxu0 0.0
    %117 = vmatprep.subr.mxu0 0.0
    %118 = vmatpush1.xpose.msra.mxu0 0.0
    %119 = vmatprep.subr.mxu0 0.0
    %120 = vmatpush1.xpose.msra.mxu0 0.0
    %121 = vmatprep.subr.mxu0 0.0
    %122 = vmatpush1.xpose.msra.mxu0 0.0
    %123 = vmatprep.subr.mxu0 0.0
    %124 = vmatpush1.xpose.msra.mxu0 0.0
    %125 = vmatprep.subr.mxu0 0.0
    %126 = vmatpush1.xpose.msra.mxu0 0.0
    %127 = vmatprep.subr.mxu0 0.0
    %128 = vmatpush1.xpose.msra.mxu0 0.0
    %129 = vmatprep.subr.mxu0 0.0
    %130 = vmatpush1.xpose.msra.mxu0 0.0
    %131 = vmatprep.mubr.f32.mxu0 0.0
    %132 = vmatmul.mubr.f32.gmra.mrb[0].mxu0 %v53
    %v133 = vpop.f32.mrb[0].mxu0
    %v134 = vadd.f32 %v34, %v133
    %v135 = vpop.f32.mrb[0].mxu0
    %136 = vmatprep.mubr.f32.mxu0 0.0
    %137 = vmatmul.mubr.f32.gmra.mrb[0].mxu0 %v56
    %v138 = vpop.f32.mrb[0].mxu0
    %v139 = vadd.f32 %v39, %v138
    %v140 = vpop.f32.mrb[0].mxu0
    %141 = vmatprep.mubr.f32.mxu0 0.0
    %142 = vmatmul.mubr.f32.gmra.mrb[0].mxu0 %v59
    %v143 = vpop.f32.mrb[0].mxu0
    %v144 = vadd.f32 %v44, %v143
    %v145 = vpop.f32.mrb[0].mxu0
    %146 = vmatprep.mubr.f32.mxu0 0.0
    %147 = vmatmul.mubr.f32.gmra.mrb[0].mxu0 %v62
    %v148 = vpop.f32.mrb[0].mxu0
    %v149 = vadd.f32 %v49, %v148
    %v150 = vpop.f32.mrb[0].mxu0
    %151 = vdwg.mxu0
    %v152 = vmax.f32 %v134, 0.0
    %v153 = vmax.f32 %v139, 0.0
    %v154 = vmax.f32 %v144, 0.0
    %v155 = vmax.f32 %v149, 0.0
    %v156 = vld [vmem:[%s3] sm:$0xff]
    %v157 = vld [vmem:[%s3 + $0x8] sm:$0xff]
    %v158 = vld [vmem:[%s3 + $0x10] sm:$0xff]
    %v159 = vld [vmem:[%s3 + $0x18] sm:$0xff]
    %161 = vset.pattern.permute.xlu0 0
    %162 = vperm.xlu0 %161, %v156
    %v163 = vpop.permute.xlu0 %162
    %166 = vset.pattern.permute.xlu0 0
    %167 = vperm.xlu0 %166, %v157
    %v168 = vpop.permute.xlu0 %167
    %171 = vset.pattern.permute.xlu0 0
    %172 = vperm.xlu0 %171, %v158
    %v173 = vpop.permute.xlu0 %172
    %176 = vset.pattern.permute.xlu0 0
    %177 = vperm.xlu0 %176, %v159
    %v178 = vpop.permute.xlu0 %177
    %v180 = vmul.f32 %v152, %v163
    %v181 = vmul.f32 %v153, %v168
    %v182 = vmul.f32 %v154, %v173
    %v183 = vmul.f32 %v155, %v178
    %vm184 = vcmask 64512
    %v185 = vsel %vm184, %v180, 0.0
    %v186 = vsel %vm184, %v181, 0.0
    %v187 = vadd.f32 %v185, %v186
    %v188 = vsel %vm184, %v182, 0.0
    %v189 = vadd.f32 %v187, %v188
    %v190 = vsel %vm184, %v183, 0.0
    %v191 = vadd.f32 %v189, %v190
    %v192 = vrot.slane %v191, 4
    %v193 = vadd.f32 %v191, %v192
    %v194 = vrot.slane %v193, 2
    %v195 = vadd.f32 %v193, %v194
    %v196 = vrot.slane %v195, 1
    %v197 = vadd.f32 %v195, %v196
    %s198 = sld [smem:[#allocation2]]
    %v199 = vstv %s198
    %v200 = vadd.f32 %v197, %v199
    %vm201 = vcmask 57344
    %202 = vst.msk [vmem:[#allocation3] sm:$0x1] %vm201, %v200
    // Predicated region
    $region22: #{value_net_forward.1} parent=1 // pred_check
      _
    $region23: #{value_net_forward.1} parent=1 // pred_check_branch
      %204 = sbr.rel (0) target = $region25
    $region24: #{value_net_forward.1} parent=1 // pred_region
      %s206 = ssub.s32 16, 16
      %207 = vsyncadd [#allocation4], %s206
      %s209 = sshll.u32 [#allocation3], 4
      %s210 = int_to_ptr.vmem [resolvable:$true] %s209
      %212 = dma.vmem_to_hbm [thread:$0]  %s210, 16, %s5, [#allocation4]
    $region25: #{value_net_forward.1} parent=1 // pred_fallthru
      _
    // Predicated region
    $region26: #{value_net_forward.1} parent=1 // pred_check
      _
    $region27: #{value_net_forward.1} parent=1 // pred_check_branch
      %214 = sbr.rel (0) target = $region29
    $region28: #{value_net_forward.1} parent=1 // pred_region
      %215 = dma.done [#allocation4], 16
    $region29: #{value_net_forward.1} parent=1 // pred_fallthru
      _
    %216 = vsyncpa [#allocation4], 1

</llo_original>
